<compile_context>
chip_gen: v7x
topology: tpu7x:2x2x1
jax: 0.10.0
libtpu: 0.0.40
codegen_flags: <defaults>
</compile_context>

<pallas_src>
import jax
import jax.numpy as jnp
from jax.experimental import pallas as pl
from jax.experimental.pallas import tpu as pltpu


def _patch_add_kernel(p_ref, x_ref, o_ref):
    # p_ref: (1,  C, rows_cov, W)  zero-padded patch slab (same block every step)
    # x_ref: (TB, C, rows_cov, W)  top rows of TB images
    # o_ref: (TB, C, rows_cov, W)  output block (HBM-aliased to x)
    o_ref[...] = x_ref[...] + p_ref[...]


def _round_up(n, m):
    return ((n + m - 1) // m) * m


def _choose_batch_tile(B, bytes_per_image, block_budget_bytes=4 * 1024 * 1024):
    """Images per block: big enough to amortize the ~0.35us/step pipeline cost,
    small enough that double-buffered in+out (~4x block) fits comfortably in
    scoped VMEM on every generation (incl. v7x), and leaving >= 2 grid steps
    when B >= 2 so both v7x TensorCores get work."""
    tb = max(1, min(B, block_budget_bytes // max(bytes_per_image, 1)))
    if B >= 2:
        tb = min(tb, (B + 1) // 2)
    while B % tb:  # avoid partial blocks
        tb -= 1
    return tb


def fixed_patch_prompter(x, patch):
    """x: (B, C, H, W); patch: (1, C, ps, ps).
    Returns x with the patch added to the top-left ps x ps corner
    (functional version of the module's in-place +=)."""
    B, C, H, W = x.shape
    _, _, ps_h, ps_w = patch.shape

    # Rows we must cover: round the patch height up to the sublane multiple (8)
    # so the block obeys the (8, 128) rule; clamp to H (a full-dim block is
    # always legal).
    rows_cov = min(H, _round_up(ps_h, 8))

    # Tiny zero-padded patch slab (1, C, rows_cov, W): rows >= ps_h and columns
    # >= ps_w are zero, so the add is a no-op outside the true patch region.
    patch_slab = jnp.pad(
        patch.astype(x.dtype),
        ((0, 0), (0, 0), (0, rows_cov - ps_h), (0, W - ps_w)),
    )

    itemsize = jnp.dtype(x.dtype).itemsize
    bytes_per_image = C * rows_cov * W * itemsize
    tb = _choose_batch_tile(B, bytes_per_image)
    grid = (B // tb,)

    x_block = (tb, C, rows_cov, W)
    p_block = (1, C, rows_cov, W)

    return pl.pallas_call(
        _patch_add_kernel,
        out_shape=jax.ShapeDtypeStruct((B, C, H, W), x.dtype),
        grid_spec=pltpu.PrefetchScalarGridSpec(
            num_scalar_prefetch=0,
            grid=grid,
            in_specs=[
                pl.BlockSpec(p_block, lambda b: (0, 0, 0, 0)),
                pl.BlockSpec(x_block, lambda b: (b, 0, 0, 0)),
            ],
            out_specs=pl.BlockSpec(x_block, lambda b: (b, 0, 0, 0)),
        ),
        # Output buffer IS x: image rows rows_cov..H-1 never move through the
        # kernel; only the covered top rows are read, updated, and written back.
        input_output_aliases={1: 0},
        compiler_params=pltpu.CompilerParams(
            dimension_semantics=("parallel",),
        ),
    )(patch_slab, x)


if __name__ == "__main__":
    # Small shapes consistent with the module: image_size=16, prompt_size=4.
    B, C, H, W = 2, 3, 16, 16
    ps = 4

    key = jax.random.PRNGKey(0)
    kx, kp = jax.random.split(key)
    x = jax.random.normal(kx, (B, C, H, W), dtype=jnp.float32)
    # Deterministic parameter init (stand-in for torch.randn(1, 3, ps, ps)).
    patch = jax.random.normal(kp, (1, C, ps, ps), dtype=jnp.float32)

    out = fixed_patch_prompter(x, patch)
    out = jax.block_until_ready(out)

    # Reference check in plain JAX.
    ref = x.at[:, :, :ps, :ps].add(patch)
    assert out.shape == (B, C, H, W)
    assert jnp.allclose(out, ref, atol=1e-6), "mismatch vs reference"

    print("KERNEL_OK")
</pallas_src>

<mosaic_0001>
module attributes {stable_mosaic.version = 11 : i64} {
  func.func @_patch_add_kernel(%arg0: i32, %arg1: memref<1x3x8x16xf32, #tpu.memory_space<vmem>>, %arg2: memref<1x3x8x16xf32, #tpu.memory_space<vmem>>, %arg3: memref<1x3x8x16xf32, #tpu.memory_space<vmem>>) attributes {dimension_semantics = [#tpu.dimension_semantics<parallel>], iteration_bounds = array<i64: 2>, scalar_prefetch = 0 : i64, scratch_operands = 0 : i64, tpu.core_type = #tpu.core_type<tc>, window_params = [{pipeline_mode = #tpu.pipeline_mode<synchronous>, transform_indices = @transform_0, window_bounds = array<i64: 1, 3, 8, 16>}, {transform_indices = @transform_1, window_bounds = array<i64: 1, 3, 8, 16>}, {transform_indices = @transform_2, window_bounds = array<i64: 1, 3, 8, 16>}]} {
    %c0 = arith.constant 0 : index
    %c0_0 = arith.constant 0 : index
    %c0_1 = arith.constant 0 : index
    %c0_2 = arith.constant 0 : index
    %0 = vector.load %arg2[%c0, %c0_0, %c0_1, %c0_2] : memref<1x3x8x16xf32, #tpu.memory_space<vmem>>, vector<1x3x8x16xf32>
    %c0_3 = arith.constant 0 : index
    %c0_4 = arith.constant 0 : index
    %c0_5 = arith.constant 0 : index
    %c0_6 = arith.constant 0 : index
    %1 = vector.load %arg1[%c0_3, %c0_4, %c0_5, %c0_6] : memref<1x3x8x16xf32, #tpu.memory_space<vmem>>, vector<1x3x8x16xf32>
    %2 = arith.addf %0, %1 : vector<1x3x8x16xf32>
    %c0_7 = arith.constant 0 : index
    %c0_8 = arith.constant 0 : index
    %c0_9 = arith.constant 0 : index
    %c0_10 = arith.constant 0 : index
    %3 = vector.load %arg3[%c0_7, %c0_8, %c0_9, %c0_10] : memref<1x3x8x16xf32, #tpu.memory_space<vmem>>, vector<1x3x8x16xf32>
    tpu.vector_store %arg3[%c0_7, %c0_8, %c0_9, %c0_10], %2 {strides = array<i32>} : memref<1x3x8x16xf32, #tpu.memory_space<vmem>>, vector<1x3x8x16xf32>,
    return
  }
  func.func @transform_0(%arg0: i32) -> (i32, i32, i32, i32) {
    %c0_i32 = arith.constant 0 : i32
    %c0_i32_0 = arith.constant 0 : i32
    %c0_i32_1 = arith.constant 0 : i32
    %c0_i32_2 = arith.constant 0 : i32
    %c0_i32_3 = arith.constant 0 : i32
    return %c0_i32, %c0_i32_0, %c0_i32_1, %c0_i32_2 : i32, i32, i32, i32
  }
  func.func @transform_1(%arg0: i32) -> (i32, i32, i32, i32) {
    %c0_i32 = arith.constant 0 : i32
    %c0_i32_0 = arith.constant 0 : i32
    %c0_i32_1 = arith.constant 0 : i32
    %c0_i32_2 = arith.constant 0 : i32
    return %arg0, %c0_i32, %c0_i32_0, %c0_i32_1 : i32, i32, i32, i32
  }
  func.func @transform_2(%arg0: i32) -> (i32, i32, i32, i32) {
    %c0_i32 = arith.constant 0 : i32
    %c0_i32_0 = arith.constant 0 : i32
    %c0_i32_1 = arith.constant 0 : i32
    %c0_i32_2 = arith.constant 0 : i32
    return %arg0, %c0_i32, %c0_i32_0, %c0_i32_1 : i32, i32, i32, i32
  }
}

</mosaic_0001>

<llo_original>
// kernel: tpu_custom_call.1
$region0: #{tpu_custom_call.1}
  #allocation0 [shape = 'u32[]', space=smem, size = 0x4, offset = 0x4, fixed_abs, tag = 'smem constant byte address 0x4 - core index']
  #allocation1 [shape = 'u32[144,128]{1,0:T(1,128)}', space=vmem, size = 0x12000, scoped, tag = 'internal scratch']
  %s0 = inlined_call_operand.vmem [shape: f32[1,3,8,16], index: 0, kind: input, shape index: {}]
  %s1 = inlined_call_operand.hbm [shape: f32[2,3,16,16], index: 1, kind: input, shape index: {}, may-alias: {1,2}]
  %s2 = inlined_call_operand.hbm [shape: f32[2,3,16,16], index: 2, kind: output, shape index: {}, may-alias: {1,2}]
  %s3 = sld [smem:[#allocation0]]
  $region45: #{tpu_custom_call.1} parent=0
    _
  %s5 = ssub.s32 1, %s3
  %s6 = scalar_select 0, %s5, %s3
  $region1: #{tpu_custom_call.1} parent=0
    #allocation2 [shape = 'u8[24576]{0}', space=vmem, size = 0x6000, scoped, tag = 'input window, operand 1']
    #allocation3 [shape = 's32[2]{0}', space=sflag, size = 0x8, scoped, tag = 'scoped memory for tpu_custom_call.1']
    #allocation4 [shape = 's32[2]{0}', space=sflag, size = 0x8, scoped, tag = 'scoped memory for tpu_custom_call.1']
    #allocation5 [shape = 'u8[24576]{0}', space=vmem, size = 0x6000, scoped, tag = 'output window, operand 0']
    %7 = vsyncpa [#allocation3], 0
    %s8 = scalar_lea.sflag [#allocation3], 1
    %9 = vsyncpa %s8, 0
    %10 = vsyncpa [#allocation4], 0
    %s11 = scalar_lea.sflag [#allocation4], 1
    %12 = vsyncpa %s11, 0
    loop: start=0, step=1, limit=4
    $region2: #{tpu_custom_call.1} parent=1 // loop_pre_header
      _
    $region3: #{tpu_custom_call.1} parent=1 // loop_header
      %s14 = sphi 0, %s18
      %p15 = scmp.ge.s32.totalorder %s14, 4
      %s22 = sphi 0, %s22
      %s24 = sphi 0, %s22
      %s25 = sphi 0, %s24
      %s39 = sphi 0, %s25
      %s45 = sphi 0, %s47
      %s48 = sphi 0, %s45
      %s49 = sphi 0, %s48
      %s65 = sphi 0, %s49
      %s71 = sphi 0, %s73
      %s74 = sphi 0, %s71
      %s75 = sphi 0, %s74
      %s91 = sphi 0, %s75
    $region4: #{tpu_custom_call.1} parent=1 // loop_header_branch
      %17 = sbr.rel (%p15) target = $region8
    $region5: #{tpu_custom_call.1} parent=1 // loop_body
      %s19 = ssub.s32 %s14, 1
      %s20 = ssub.s32 %s14, 2
      %s21 = sadd.s32 %s14, 1
      %s23 = sadd.s32 %s22, 1
      %p26 = scmp.eq.s32.totalorder %s14, 1
      %p27 = scmp.ne.s32.totalorder %s22, %s24
      %p28 = scmp.eq.s32.totalorder %s14, 0
      %p29 = por %p27, %p28
      %p30 = scmp.ne.s32.totalorder %s22, %s24
      %p31 = scmp.eq.s32.totalorder %s19, 1
      %p32 = por %p30, %p31
      %p33 = scmp.ne.s32.totalorder %s24, %s25
      %p34 = scmp.eq.s32.totalorder %s19, 0
      %p35 = por %p33, %p34
      %p36 = scmp.ne.s32.totalorder %s24, %s25
      %p37 = scmp.eq.s32.totalorder %s20, 1
      %p38 = por %p36, %p37
      %p40 = scmp.ne.s32.totalorder %s25, %s39
      %p41 = scmp.eq.s32.totalorder %s20, 0
      %p42 = por %p40, %p41
      %s43 = ssub.s32 %s14, %s21
      %p44 = scmp.eq.s32.totalorder %s43, 0
      %s46 = sadd.s32 %s45, 1
      %s47 = scalar_select %p44, %s45, %s46
      %p50 = pneg %p44
      %p51 = scmp.eq.s32.totalorder %s14, 1
      %p52 = por %p50, %p51
      %p53 = scmp.ne.s32.totalorder %s45, %s48
      %p54 = scmp.eq.s32.totalorder %s14, 0
      %p55 = por %p53, %p54
      %p56 = scmp.ne.s32.totalorder %s45, %s48
      %p57 = scmp.eq.s32.totalorder %s19, 1
      %p58 = por %p56, %p57
      %p59 = scmp.ne.s32.totalorder %s48, %s49
      %p60 = scmp.eq.s32.totalorder %s19, 0
      %p61 = por %p59, %p60
      %p62 = scmp.ne.s32.totalorder %s48, %s49
      %p63 = scmp.eq.s32.totalorder %s20, 1
      %p64 = por %p62, %p63
      %p66 = scmp.ne.s32.totalorder %s49, %s65
      %p67 = scmp.eq.s32.totalorder %s20, 0
      %p68 = por %p66, %p67
      %s69 = ssub.s32 %s14, %s21
      %p70 = scmp.eq.s32.totalorder %s69, 0
      %s72 = sadd.s32 %s71, 1
      %s73 = scalar_select %p70, %s71, %s72
      %p76 = pneg %p70
      %p77 = scmp.eq.s32.totalorder %s14, 1
      %p78 = por %p76, %p77
      %p79 = scmp.ne.s32.totalorder %s71, %s74
      %p80 = scmp.eq.s32.totalorder %s14, 0
      %p81 = por %p79, %p80
      %p82 = scmp.ne.s32.totalorder %s71, %s74
      %p83 = scmp.eq.s32.totalorder %s19, 1
      %p84 = por %p82, %p83
      %p85 = scmp.ne.s32.totalorder %s74, %s75
      %p86 = scmp.eq.s32.totalorder %s19, 0
      %p87 = por %p85, %p86
      %p88 = scmp.ne.s32.totalorder %s74, %s75
      %p89 = scmp.eq.s32.totalorder %s20, 1
      %p90 = por %p88, %p89
      %p92 = scmp.ne.s32.totalorder %s75, %s91
      %p93 = scmp.eq.s32.totalorder %s20, 0
      %p94 = por %p92, %p93
      %p95 = scmp.le.s32.totalorder 1, %s14
      %p96 = scmp.lt.s32.totalorder %s14, 3
      %p97 = pnand %p95, %p96
      %p98 = pneg %p97
      // Predicated region
      $region9: #{tpu_custom_call.1} parent=5 // pred_check
        _
      $region10: #{tpu_custom_call.1} parent=5 // pred_check_branch
        %100 = sbr.rel (%p97) target = $region12
      $region11: #{tpu_custom_call.1} parent=5 // pred_region
        %s101 = ssub.s32 %s14, 1
        // Predicated region
        $region13: #{tpu_custom_call.1} parent=11 // pred_check
          %p102 = pneg %p35
        $region14: #{tpu_custom_call.1} parent=11 // pred_check_branch
          %104 = sbr.rel (%p102) target = $region16
        $region15: #{tpu_custom_call.1} parent=11 // pred_region
          _
        $region16: #{tpu_custom_call.1} parent=11 // pred_fallthru
          _
      $region12: #{tpu_custom_call.1} parent=5 // pred_fallthru
        _
      %p105 = scmp.lt.s32.totalorder %s14, 2
      // Predicated region
      $region17: #{tpu_custom_call.1} parent=5 // pred_check
        %p106 = pneg %p105
      $region18: #{tpu_custom_call.1} parent=5 // pred_check_branch
        %108 = sbr.rel (%p106) target = $region20
      $region19: #{tpu_custom_call.1} parent=5 // pred_region
        // Predicated region
        $region21: #{tpu_custom_call.1} parent=19 // pred_check
          %p109 = pneg %p55
        $region22: #{tpu_custom_call.1} parent=19 // pred_check_branch
          %111 = sbr.rel (%p109) target = $region24
        $region23: #{tpu_custom_call.1} parent=19 // pred_region
          %s112 = sand.u32 %s45, 1
          %s113 = scalar_lea.sflag [#allocation3], %s112
          %s114 = sand.u32 %s45, 1
          %s115 = smul.addr %s114, 24
          %s116 = scalar_lea.vmem [#allocation2], %s115
          %s118 = ssub.s32 384, 384
          %119 = vsyncadd %s113, %s118
          %s120 = smul.addr %s14, 6
          %s121 = smul.addr %s120, 128
          %s122 = scalar_lea.hbm %s1, %s121
          %s123 = sshll.u32 %s116, 4
          %s124 = int_to_ptr.vmem [resolvable:$true] %s123
          %129 = dma.hbm_to_vmem [thread:$0]  %s122, 384, %s124, %s113, 256, 128, 8
        $region24: #{tpu_custom_call.1} parent=19 // pred_fallthru
          _
      $region20: #{tpu_custom_call.1} parent=5 // pred_fallthru
        _
      %p130 = scmp.le.s32.totalorder 1, %s14
      %p131 = scmp.lt.s32.totalorder %s14, 3
      %p132 = pnand %p130, %p131
      %p133 = pneg %p132
      // Predicated region
      $region25: #{tpu_custom_call.1} parent=5 // pred_check
        _
      $region26: #{tpu_custom_call.1} parent=5 // pred_check_branch
        %135 = sbr.rel (%p132) target = $region28
      $region27: #{tpu_custom_call.1} parent=5 // pred_region
        %s136 = ssub.s32 %s14, 1
        %s137 = sand.u32 %s48, 1
        %s138 = scalar_lea.sflag [#allocation3], %s137
        %s139 = sand.u32 %s48, 1
        %s140 = smul.addr %s139, 24
        %s141 = scalar_lea.vmem [#allocation2], %s140
        // Predicated region
        $region29: #{tpu_custom_call.1} parent=27 // pred_check
          %p142 = pneg %p61
        $region30: #{tpu_custom_call.1} parent=27 // pred_check_branch
          %144 = sbr.rel (%p142) target = $region32
        $region31: #{tpu_custom_call.1} parent=27 // pred_region
          %145 = dma.done %s138, 384
        $region32: #{tpu_custom_call.1} parent=27 // pred_fallthru
          _
        %p146 = pneg %p35
        %p147 = pneg %p32
        %s148 = sand.u32 %s48, 1
        %s149 = scalar_lea.sflag [#allocation3], %s148
        %s150 = sand.u32 %s48, 1
        %s151 = smul.addr %s150, 24
        %s152 = scalar_lea.vmem [#allocation2], %s151
        %p153 = pneg %p61
        %p154 = pneg %p58
        %p155 = pneg %p87
        %p156 = pneg %p84
        %s157 = sand.u32 %s74, 1
        %s158 = scalar_lea.sflag [#allocation4], %s157
        %s159 = sand.u32 %s74, 1
        %s160 = smul.addr %s159, 24
        %s161 = scalar_lea.vmem [#allocation5], %s160
        %v162 = vld [vmem:[%s141] sm:$0xff]
        %v163 = vld [vmem:[%s141 + $0x8] sm:$0xff]
        %v164 = vld [vmem:[%s141 + $0x10] sm:$0xff]
        %v165 = vld [vmem:[%s0] sm:$0xff]
        %v166 = vld [vmem:[%s0 + $0x8] sm:$0xff]
        %v167 = vld [vmem:[%s0 + $0x10] sm:$0xff]
        %v168 = vadd.f32 %v162, %v165
        %v169 = vadd.f32 %v163, %v166
        %v170 = vadd.f32 %v164, %v167
        %vm171 = vcmask 130048
        %172 = vst.msk [vmem:[%s161] sm:$0xff] %vm171, %v168
        %173 = vst.msk [vmem:[%s161 + $0x8] sm:$0xff] %vm171, %v169
        %174 = vst.msk [vmem:[%s161 + $0x10] sm:$0xff] %vm171, %v170
        %s175 = sand.u32 %s74, 1
        %s176 = scalar_lea.sflag [#allocation4], %s175
        %s177 = sand.u32 %s74, 1
        %s178 = smul.addr %s177, 24
        %s179 = scalar_lea.vmem [#allocation5], %s178
        // Predicated region
        $region33: #{tpu_custom_call.1} parent=27 // pred_check
          %p180 = pneg %p84
        $region34: #{tpu_custom_call.1} parent=27 // pred_check_branch
          %182 = sbr.rel (%p180) target = $region36
        $region35: #{tpu_custom_call.1} parent=27 // pred_region
          %s184 = ssub.s32 384, 384
          %185 = vsyncadd %s176, %s184
          %s186 = smul.addr %s19, 6
          %s187 = smul.addr %s186, 128
          %s188 = scalar_lea.hbm %s2, %s187
          %s189 = sshll.u32 %s179, 4
          %s190 = int_to_ptr.vmem [resolvable:$true] %s189
          %195 = dma.vmem_to_hbm [thread:$0]  %s190, 384, %s188, %s176, 128, 256, 8
        $region36: #{tpu_custom_call.1} parent=27 // pred_fallthru
          _
      $region28: #{tpu_custom_call.1} parent=5 // pred_fallthru
        _
      %p196 = scmp.le.s32.totalorder 2, %s14
      // Predicated region
      $region37: #{tpu_custom_call.1} parent=5 // pred_check
        %p197 = pneg %p196
      $region38: #{tpu_custom_call.1} parent=5 // pred_check_branch
        %199 = sbr.rel (%p197) target = $region40
      $region39: #{tpu_custom_call.1} parent=5 // pred_region
        %s200 = ssub.s32 %s14, 2
        // Predicated region
        $region41: #{tpu_custom_call.1} parent=39 // pred_check
          %p201 = pneg %p90
        $region42: #{tpu_custom_call.1} parent=39 // pred_check_branch
          %203 = sbr.rel (%p201) target = $region44
        $region43: #{tpu_custom_call.1} parent=39 // pred_region
          %s204 = sand.u32 %s75, 1
          %s205 = scalar_lea.sflag [#allocation4], %s204
          %s206 = sand.u32 %s75, 1
          %s207 = smul.addr %s206, 24
          %s208 = scalar_lea.vmem [#allocation5], %s207
          %209 = dma.done %s205, 384
        $region44: #{tpu_custom_call.1} parent=39 // pred_fallthru
          _
      $region40: #{tpu_custom_call.1} parent=5 // pred_fallthru
        _
    $region6: #{tpu_custom_call.1} parent=1 // loop_footer
      %s18 = sadd.s32 1, %s14
    $region7: #{tpu_custom_call.1} parent=1 // loop_footer_branch
      %13 = sbr.rel target = $region3
    $region8: #{tpu_custom_call.1} parent=1 // loop_exit
      _
    %210 = vsyncpa [#allocation3], 1
    %s211 = scalar_lea.sflag [#allocation3], 1
    %212 = vsyncpa %s211, 1
    %213 = vsyncpa [#allocation4], 1
    %s214 = scalar_lea.sflag [#allocation4], 1
    %215 = vsyncpa %s214, 1

</llo_original>
